<compile_context>
chip_gen: v7x
topology: tpu7x:2x2x1
jax: 0.10.0
libtpu: 0.0.40
codegen_flags: <defaults>
</compile_context>

<pallas_src>
import functools
import math

import jax
import jax.numpy as jnp
from jax.experimental import pallas as pl
from jax.experimental.pallas import tpu as pltpu

PACK = 32                 # original rows packed into the 128-lane dimension (32 * 4 feats = 128)
DEFAULT_TILE_T = 4096     # packed rows per grid step (= 131072 original rows, ~4 MiB I/O / step)


def _round_up(n, m):
    return ((n + m - 1) // m) * m


def _mlp_kernel(x_ref, w1_ref, b1_ref, w2_ref, b2_ref, w3_ref, b3_ref, o_ref):
    """Fused 3-layer MLP on one row tile: relu(x@W1+b1) -> relu(.@W2+b2) -> .@W3+b3."""
    x = x_ref[...]
    h = jnp.dot(x, w1_ref[...], preferred_element_type=jnp.float32) + b1_ref[...]
    h = jnp.maximum(h, 0.0)
    h = jnp.dot(h, w2_ref[...], preferred_element_type=jnp.float32) + b2_ref[...]
    h = jnp.maximum(h, 0.0)
    o_ref[...] = jnp.dot(h, w3_ref[...], preferred_element_type=jnp.float32) + b3_ref[...]


def _mlp_pallas(x2d, weights, tile):
    """Run the fused MLP over a [N, fin] matrix, tiled along the row (batch) axis."""
    n_rows, fin = x2d.shape
    w1, b1, w2, b2, w3, b3 = weights
    fout = w3.shape[1]
    # Partial last block is fine: OOB reads are row-local garbage (rows are independent through
    # the MLP) and OOB writes are dropped by the pipeline, so valid rows are unaffected.
    grid = (pl.cdiv(n_rows, tile),)

    def data_spec(f):
        return pl.BlockSpec((tile, f), lambda i: (i, 0))

    def resident_spec(shape):
        # Constant index_map -> same block every grid step -> stays VMEM-resident, no re-DMA.
        return pl.BlockSpec(shape, lambda i: (0, 0))

    return pl.pallas_call(
        _mlp_kernel,
        out_shape=jax.ShapeDtypeStruct((n_rows, fout), jnp.float32),
        grid=grid,
        in_specs=[
            data_spec(fin),                                    # x tile
            resident_spec(w1.shape), resident_spec(b1.shape),  # layer 1
            resident_spec(w2.shape), resident_spec(b2.shape),  # layer 2
            resident_spec(w3.shape), resident_spec(b3.shape),  # layer 3
        ],
        out_specs=data_spec(fout),
        compiler_params=pltpu.CompilerParams(
            dimension_semantics=("parallel",),  # batch axis -> both TensorCores on v7x megacore
        ),
    )(x2d, w1, b1, w2, b2, w3, b3)


def _block_diag(w, pack):
    """[fin, fout] -> block-diagonal [pack*fin, pack*fout] (pack copies of w on the diagonal)."""
    fin, fout = w.shape
    eye = jnp.eye(pack, dtype=w.dtype)
    return jnp.einsum("ij,ab->iajb", eye, w).reshape(pack * fin, pack * fout)


def _packed_weights(params, pack):
    (w1, b1), (w2, b2), (w3, b3) = params["fc1"], params["fc2"], params["fc3"]
    return (
        _block_diag(w1, pack), jnp.tile(b1, pack).reshape(1, -1),   # [128,320], [1,320]
        _block_diag(w2, pack), jnp.tile(b2, pack).reshape(1, -1),   # [320,128], [1,128]
        _block_diag(w3, pack), jnp.tile(b3, pack).reshape(1, -1),   # [128,128], [1,128]
    )


def _natural_weights(params):
    (w1, b1), (w2, b2), (w3, b3) = params["fc1"], params["fc2"], params["fc3"]
    return (w1, b1.reshape(1, -1), w2, b2.reshape(1, -1), w3, b3.reshape(1, -1))


def _pick_packed_tile(n_packed_rows, tile_t):
    if n_packed_rows <= 16:
        return n_packed_rows  # single full-array block (exempt from the (8,128) rule)
    # >= 2 grid steps so v7x megacore can split the batch; sublane-aligned (multiple of 8).
    return max(8, min(tile_t, _round_up(pl.cdiv(n_packed_rows, 2), 8)))


@functools.partial(jax.jit, static_argnames=("tile_t",))
def weather_nn_forward(x, params, tile_t=DEFAULT_TILE_T):
    """x: [batch, 4] float32. params: dict of (w, b) per layer, w stored as [in, out]."""
    x = x.astype(jnp.float32)
    batch, in_f = x.shape
    tile_t = _round_up(max(int(tile_t), 8), 8)  # keep user-provided tiles sublane-aligned

    main = (batch // PACK) * PACK   # rows handled on the packed (lane-dense) fast path
    rem = batch - main              # < PACK leftover rows -> tiny second pallas_call

    pieces = []
    if main > 0:
        x_main = x if rem == 0 else x[:main]                   # zero-copy when batch % 32 == 0
        x_packed = x_main.reshape(main // PACK, PACK * in_f)   # row-major -> free reshape
        tile = _pick_packed_tile(main // PACK, tile_t)
        out_packed = _mlp_pallas(x_packed, _packed_weights(params, PACK), tile)
        pieces.append(out_packed.reshape(main, -1))            # free reshape back to [main, 4]
    if rem > 0:
        pieces.append(_mlp_pallas(x[main:], _natural_weights(params), rem))

    return pieces[0] if len(pieces) == 1 else jnp.concatenate(pieces, axis=0)


def init_params(key):
    """Deterministic init matching the PyTorch module's shapes.
    Weights: xavier_uniform_. Biases: PyTorch Linear default U(-1/sqrt(fan_in), 1/sqrt(fan_in))."""
    dims = {"fc1": (4, 10), "fc2": (10, 4), "fc3": (4, 4)}
    params = {}
    for name, (fan_in, fan_out) in dims.items():
        key, kw, kb = jax.random.split(key, 3)
        bound_w = math.sqrt(6.0 / (fan_in + fan_out))
        w = jax.random.uniform(kw, (fan_in, fan_out), jnp.float32, -bound_w, bound_w)
        bound_b = 1.0 / math.sqrt(fan_in)
        b = jax.random.uniform(kb, (fan_out,), jnp.float32, -bound_b, bound_b)
        params[name] = (w, b)
    return params


def _reference_forward(x, params):
    (w1, b1), (w2, b2), (w3, b3) = params["fc1"], params["fc2"], params["fc3"]
    h = jnp.maximum(x @ w1 + b1, 0.0)
    h = jnp.maximum(h @ w2 + b2, 0.0)
    return h @ w3 + b3


if __name__ == "__main__":
    key = jax.random.PRNGKey(0)
    key, kx1, kx2, kx3 = jax.random.split(key, 4)
    params = init_params(key)

    # Small case from the module spec: batch=2, 4 weather features (remainder-only path).
    x1 = jax.random.normal(kx1, (2, 4), dtype=jnp.float32)
    out1 = jax.block_until_ready(weather_nn_forward(x1, params))
    ref1 = _reference_forward(x1, params)
    assert out1.shape == (2, 4)
    assert jnp.allclose(out1, ref1, atol=1e-5, rtol=1e-5), "mismatch vs JAX reference (batch=2)"

    # Packed fast path: batch % 32 == 0 -> zero-copy reshape, 2 parallel grid steps, no concat.
    x2 = jax.random.normal(kx2, (4096, 4), dtype=jnp.float32)
    out2 = jax.block_until_ready(weather_nn_forward(x2, params))
    ref2 = _reference_forward(x2, params)
    assert out2.shape == (4096, 4)
    assert jnp.allclose(out2, ref2, atol=1e-4, rtol=1e-4), "mismatch vs JAX reference (batch=4096)"

    # Mixed path: partial last packed tile (100 packed rows, tile 32) + a 7-row remainder call.
    x3 = jax.random.normal(kx3, (3207, 4), dtype=jnp.float32)
    out3 = jax.block_until_ready(weather_nn_forward(x3, params, tile_t=32))
    ref3 = _reference_forward(x3, params)
    assert out3.shape == (3207, 4)
    assert jnp.allclose(out3, ref3, atol=1e-4, rtol=1e-4), "mismatch vs JAX reference (batch=3207)"

    print("KERNEL_OK")
</pallas_src>

<mosaic_0001>
module attributes {stable_mosaic.version = 11 : i64} {
  func.func @_mlp_kernel(%arg0: i32, %arg1: memref<2x4xf32, #tpu.memory_space<vmem>>, %arg2: memref<4x10xf32, #tpu.memory_space<vmem>>, %arg3: memref<1x10xf32, #tpu.memory_space<vmem>>, %arg4: memref<10x4xf32, #tpu.memory_space<vmem>>, %arg5: memref<1x4xf32, #tpu.memory_space<vmem>>, %arg6: memref<4x4xf32, #tpu.memory_space<vmem>>, %arg7: memref<1x4xf32, #tpu.memory_space<vmem>>, %arg8: memref<2x4xf32, #tpu.memory_space<vmem>>) attributes {dimension_semantics = [#tpu.dimension_semantics<parallel>], iteration_bounds = array<i64: 1>, scalar_prefetch = 0 : i64, scratch_operands = 0 : i64, tpu.core_type = #tpu.core_type<tc>, window_params = [{transform_indices = @transform_0, window_bounds = array<i64: 2, 4>}, {pipeline_mode = #tpu.pipeline_mode<synchronous>, transform_indices = @transform_1, window_bounds = array<i64: 4, 10>}, {pipeline_mode = #tpu.pipeline_mode<synchronous>, transform_indices = @transform_2, window_bounds = array<i64: 1, 10>}, {pipeline_mode = #tpu.pipeline_mode<synchronous>, transform_indices = @transform_3, window_bounds = array<i64: 10, 4>}, {pipeline_mode = #tpu.pipeline_mode<synchronous>, transform_indices = @transform_4, window_bounds = array<i64: 1, 4>}, {pipeline_mode = #tpu.pipeline_mode<synchronous>, transform_indices = @transform_5, window_bounds = array<i64: 4, 4>}, {pipeline_mode = #tpu.pipeline_mode<synchronous>, transform_indices = @transform_6, window_bounds = array<i64: 1, 4>}, {transform_indices = @transform_7, window_bounds = array<i64: 2, 4>}]} {
    %c0 = arith.constant 0 : index
    %c0_0 = arith.constant 0 : index
    %0 = vector.load %arg1[%c0, %c0_0] : memref<2x4xf32, #tpu.memory_space<vmem>>, vector<2x4xf32>
    %c0_1 = arith.constant 0 : index
    %c0_2 = arith.constant 0 : index
    %1 = vector.load %arg2[%c0_1, %c0_2] : memref<4x10xf32, #tpu.memory_space<vmem>>, vector<4x10xf32>
    %cst = arith.constant dense<0.000000e+00> : vector<2x10xf32>
    %2 = tpu.matmul %0, %1, %cst {dimension_numbers = #tpu.dot_dimension_numbers<[1], [0], [0], [1], [0, 0, 1, 1], [], []>} : vector<2x4xf32>, vector<4x10xf32>, vector<2x10xf32> -> vector<2x10xf32>
    %c0_3 = arith.constant 0 : index
    %c0_4 = arith.constant 0 : index
    %3 = vector.load %arg3[%c0_3, %c0_4] : memref<1x10xf32, #tpu.memory_space<vmem>>, vector<1x10xf32>
    %4 = vector.broadcast %3 : vector<1x10xf32> to vector<2x10xf32>
    %5 = arith.addf %2, %4 : vector<2x10xf32>
    %cst_5 = arith.constant 0.000000e+00 : f32
    %6 = vector.broadcast %cst_5 : f32 to vector<2x10xf32>
    %7 = arith.maximumf %5, %6 : vector<2x10xf32>
    %c0_6 = arith.constant 0 : index
    %c0_7 = arith.constant 0 : index
    %8 = vector.load %arg4[%c0_6, %c0_7] : memref<10x4xf32, #tpu.memory_space<vmem>>, vector<10x4xf32>
    %cst_8 = arith.constant dense<0.000000e+00> : vector<2x4xf32>
    %9 = tpu.matmul %7, %8, %cst_8 {dimension_numbers = #tpu.dot_dimension_numbers<[1], [0], [0], [1], [0, 0, 1, 1], [], []>} : vector<2x10xf32>, vector<10x4xf32>, vector<2x4xf32> -> vector<2x4xf32>
    %c0_9 = arith.constant 0 : index
    %c0_10 = arith.constant 0 : index
    %10 = vector.load %arg5[%c0_9, %c0_10] : memref<1x4xf32, #tpu.memory_space<vmem>>, vector<1x4xf32>
    %11 = vector.broadcast %10 : vector<1x4xf32> to vector<2x4xf32>
    %12 = arith.addf %9, %11 : vector<2x4xf32>
    %cst_11 = arith.constant 0.000000e+00 : f32
    %13 = vector.broadcast %cst_11 : f32 to vector<2x4xf32>
    %14 = arith.maximumf %12, %13 : vector<2x4xf32>
    %c0_12 = arith.constant 0 : index
    %c0_13 = arith.constant 0 : index
    %15 = vector.load %arg6[%c0_12, %c0_13] : memref<4x4xf32, #tpu.memory_space<vmem>>, vector<4x4xf32>
    %cst_14 = arith.constant dense<0.000000e+00> : vector<2x4xf32>
    %16 = tpu.matmul %14, %15, %cst_14 {dimension_numbers = #tpu.dot_dimension_numbers<[1], [0], [0], [1], [0, 0, 1, 1], [], []>} : vector<2x4xf32>, vector<4x4xf32>, vector<2x4xf32> -> vector<2x4xf32>
    %c0_15 = arith.constant 0 : index
    %c0_16 = arith.constant 0 : index
    %17 = vector.load %arg7[%c0_15, %c0_16] : memref<1x4xf32, #tpu.memory_space<vmem>>, vector<1x4xf32>
    %18 = vector.broadcast %17 : vector<1x4xf32> to vector<2x4xf32>
    %19 = arith.addf %16, %18 : vector<2x4xf32>
    %c0_17 = arith.constant 0 : index
    %c0_18 = arith.constant 0 : index
    %20 = vector.load %arg8[%c0_17, %c0_18] : memref<2x4xf32, #tpu.memory_space<vmem>>, vector<2x4xf32>
    tpu.vector_store %arg8[%c0_17, %c0_18], %19 {strides = array<i32>} : memref<2x4xf32, #tpu.memory_space<vmem>>, vector<2x4xf32>,
    return
  }
  func.func @transform_0(%arg0: i32) -> (i32, i32) {
    %c0_i32 = arith.constant 0 : i32
    %c0_i32_0 = arith.constant 0 : i32
    return %arg0, %c0_i32 : i32, i32
  }
  func.func @transform_1(%arg0: i32) -> (i32, i32) {
    %c0_i32 = arith.constant 0 : i32
    %c0_i32_0 = arith.constant 0 : i32
    %c0_i32_1 = arith.constant 0 : i32
    return %c0_i32, %c0_i32_0 : i32, i32
  }
  func.func @transform_2(%arg0: i32) -> (i32, i32) {
    %c0_i32 = arith.constant 0 : i32
    %c0_i32_0 = arith.constant 0 : i32
    %c0_i32_1 = arith.constant 0 : i32
    return %c0_i32, %c0_i32_0 : i32, i32
  }
  func.func @transform_3(%arg0: i32) -> (i32, i32) {
    %c0_i32 = arith.constant 0 : i32
    %c0_i32_0 = arith.constant 0 : i32
    %c0_i32_1 = arith.constant 0 : i32
    return %c0_i32, %c0_i32_0 : i32, i32
  }
  func.func @transform_4(%arg0: i32) -> (i32, i32) {
    %c0_i32 = arith.constant 0 : i32
    %c0_i32_0 = arith.constant 0 : i32
    %c0_i32_1 = arith.constant 0 : i32
    return %c0_i32, %c0_i32_0 : i32, i32
  }
  func.func @transform_5(%arg0: i32) -> (i32, i32) {
    %c0_i32 = arith.constant 0 : i32
    %c0_i32_0 = arith.constant 0 : i32
    %c0_i32_1 = arith.constant 0 : i32
    return %c0_i32, %c0_i32_0 : i32, i32
  }
  func.func @transform_6(%arg0: i32) -> (i32, i32) {
    %c0_i32 = arith.constant 0 : i32
    %c0_i32_0 = arith.constant 0 : i32
    %c0_i32_1 = arith.constant 0 : i32
    return %c0_i32, %c0_i32_0 : i32, i32
  }
  func.func @transform_7(%arg0: i32) -> (i32, i32) {
    %c0_i32 = arith.constant 0 : i32
    %c0_i32_0 = arith.constant 0 : i32
    return %arg0, %c0_i32 : i32, i32
  }
}

</mosaic_0001>

<llo_original>
// kernel: weather_nn_forward.1
$region0: #{weather_nn_forward.1}
  #allocation0 [shape = 'u32[]', space=smem, size = 0x4, offset = 0x4, fixed_abs, tag = 'smem constant byte address 0x4 - core index']
  #allocation1 [shape = 'u32[144,128]{1,0:T(1,128)}', space=vmem, size = 0x12000, scoped, tag = 'internal scratch']
  %s0 = inlined_call_operand.vmem [shape: f32[2,4], index: 0, kind: input, shape index: {}]
  %s1 = inlined_call_operand.vmem [shape: f32[4,10], index: 1, kind: input, shape index: {}]
  %s2 = inlined_call_operand.vmem [shape: f32[1,10], index: 2, kind: input, shape index: {}]
  %s3 = inlined_call_operand.vmem [shape: f32[10,4], index: 3, kind: input, shape index: {}]
  %s4 = inlined_call_operand.vmem [shape: f32[1,4], index: 4, kind: input, shape index: {}]
  %s5 = inlined_call_operand.vmem [shape: f32[4,4], index: 5, kind: input, shape index: {}]
  %s6 = inlined_call_operand.vmem [shape: f32[1,4], index: 6, kind: input, shape index: {}]
  %s7 = inlined_call_operand.hbm [shape: f32[2,4], index: 7, kind: output, shape index: {}]
  %s8 = sld [smem:[#allocation0]]
  $region38: #{weather_nn_forward.1} parent=0
    _
  %s10 = ssub.s32 1, %s8
  %s11 = scalar_select 0, %s10, %s8
  $region1: #{weather_nn_forward.1} parent=0
    #allocation2 [shape = 'u8[1024]{0}', space=vmem, size = 0x400, scoped, tag = 'output window, operand 0, single buffered']
    #allocation3 [shape = 's32[1]{0}', space=sflag, size = 0x4, scoped, tag = 'scoped memory for weather_nn_forward.1']
    %12 = vsyncpa [#allocation3], 0
    // Predicated region
    $region2: #{weather_nn_forward.1} parent=1 // pred_check
      _
    $region3: #{weather_nn_forward.1} parent=1 // pred_check_branch
      %14 = sbr.rel (0) target = $region5
    $region4: #{weather_nn_forward.1} parent=1 // pred_region
      _
    $region5: #{weather_nn_forward.1} parent=1 // pred_fallthru
      _
    // Predicated region
    $region6: #{weather_nn_forward.1} parent=1 // pred_check
      _
    $region7: #{weather_nn_forward.1} parent=1 // pred_check_branch
      %16 = sbr.rel (0) target = $region9
    $region8: #{weather_nn_forward.1} parent=1 // pred_region
      _
    $region9: #{weather_nn_forward.1} parent=1 // pred_fallthru
      _
    // Predicated region
    $region10: #{weather_nn_forward.1} parent=1 // pred_check
      _
    $region11: #{weather_nn_forward.1} parent=1 // pred_check_branch
      %18 = sbr.rel (0) target = $region13
    $region12: #{weather_nn_forward.1} parent=1 // pred_region
      _
    $region13: #{weather_nn_forward.1} parent=1 // pred_fallthru
      _
    // Predicated region
    $region14: #{weather_nn_forward.1} parent=1 // pred_check
      _
    $region15: #{weather_nn_forward.1} parent=1 // pred_check_branch
      %20 = sbr.rel (0) target = $region17
    $region16: #{weather_nn_forward.1} parent=1 // pred_region
      _
    $region17: #{weather_nn_forward.1} parent=1 // pred_fallthru
      _
    // Predicated region
    $region18: #{weather_nn_forward.1} parent=1 // pred_check
      _
    $region19: #{weather_nn_forward.1} parent=1 // pred_check_branch
      %22 = sbr.rel (0) target = $region21
    $region20: #{weather_nn_forward.1} parent=1 // pred_region
      _
    $region21: #{weather_nn_forward.1} parent=1 // pred_fallthru
      _
    // Predicated region
    $region22: #{weather_nn_forward.1} parent=1 // pred_check
      _
    $region23: #{weather_nn_forward.1} parent=1 // pred_check_branch
      %24 = sbr.rel (0) target = $region25
    $region24: #{weather_nn_forward.1} parent=1 // pred_region
      _
    $region25: #{weather_nn_forward.1} parent=1 // pred_fallthru
      _
    // Predicated region
    $region26: #{weather_nn_forward.1} parent=1 // pred_check
      _
    $region27: #{weather_nn_forward.1} parent=1 // pred_check_branch
      %26 = sbr.rel (0) target = $region29
    $region28: #{weather_nn_forward.1} parent=1 // pred_region
      _
    $region29: #{weather_nn_forward.1} parent=1 // pred_fallthru
      _
    %v27 = vld [vmem:[%s0] sm:$0x3]
    %v28 = vld [vmem:[%s1] sm:$0xf]
    %v29 = vld [vmem:[%s2] sm:$0x1]
    %v31 = vlaneseq
    %v32 = vshrl.u32 %v31, 7
    %v33 = vsub.s32 0, %v32
    %v34 = vrot.slane %v29, %v33
    %vm36 = vcmask 31744
    %v38 = vsel %vm36, %v27, 0
    %vm40 = vcmask 1043456
    %v42 = vsel %vm40, %v28, 0
    %44 = vmatprep.subr.mxu0 0.0
    %45 = vmatpush1.msra.mxu0 %v42
    %46 = vmatprep.subr.mxu0 0.0
    %47 = vmatpush1.msra.mxu0 0.0
    %48 = vmatprep.subr.mxu0 0.0
    %49 = vmatpush1.msra.mxu0 0.0
    %50 = vmatprep.subr.mxu0 0.0
    %51 = vmatpush1.msra.mxu0 0.0
    %52 = vmatprep.subr.mxu0 0.0
    %53 = vmatpush1.msra.mxu0 0.0
    %54 = vmatprep.subr.mxu0 0.0
    %55 = vmatpush1.msra.mxu0 0.0
    %56 = vmatprep.subr.mxu0 0.0
    %57 = vmatpush1.msra.mxu0 0.0
    %58 = vmatprep.subr.mxu0 0.0
    %59 = vmatpush1.msra.mxu0 0.0
    %60 = vmatprep.subr.mxu0 0.0
    %61 = vmatpush1.msra.mxu0 0.0
    %62 = vmatprep.subr.mxu0 0.0
    %63 = vmatpush1.msra.mxu0 0.0
    %64 = vmatprep.subr.mxu0 0.0
    %65 = vmatpush1.msra.mxu0 0.0
    %66 = vmatprep.subr.mxu0 0.0
    %67 = vmatpush1.msra.mxu0 0.0
    %68 = vmatprep.subr.mxu0 0.0
    %69 = vmatpush1.msra.mxu0 0.0
    %70 = vmatprep.subr.mxu0 0.0
    %71 = vmatpush1.msra.mxu0 0.0
    %72 = vmatprep.subr.mxu0 0.0
    %73 = vmatpush1.msra.mxu0 0.0
    %74 = vmatprep.subr.mxu0 0.0
    %75 = vmatpush1.msra.mxu0 0.0
    %76 = vmatprep.subr.mxu0 0.0
    %77 = vmatpush1.msra.mxu0 0.0
    %78 = vmatprep.subr.mxu0 0.0
    %79 = vmatpush1.msra.mxu0 0.0
    %80 = vmatprep.subr.mxu0 0.0
    %81 = vmatpush1.msra.mxu0 0.0
    %82 = vmatprep.subr.mxu0 0.0
    %83 = vmatpush1.msra.mxu0 0.0
    %84 = vmatprep.subr.mxu0 0.0
    %85 = vmatpush1.msra.mxu0 0.0
    %86 = vmatprep.subr.mxu0 0.0
    %87 = vmatpush1.msra.mxu0 0.0
    %88 = vmatprep.subr.mxu0 0.0
    %89 = vmatpush1.msra.mxu0 0.0
    %90 = vmatprep.subr.mxu0 0.0
    %91 = vmatpush1.msra.mxu0 0.0
    %92 = vmatprep.subr.mxu0 0.0
    %93 = vmatpush1.msra.mxu0 0.0
    %94 = vmatprep.subr.mxu0 0.0
    %95 = vmatpush1.msra.mxu0 0.0
    %96 = vmatprep.subr.mxu0 0.0
    %97 = vmatpush1.msra.mxu0 0.0
    %98 = vmatprep.subr.mxu0 0.0
    %99 = vmatpush1.msra.mxu0 0.0
    %100 = vmatprep.subr.mxu0 0.0
    %101 = vmatpush1.msra.mxu0 0.0
    %102 = vmatprep.subr.mxu0 0.0
    %103 = vmatpush1.msra.mxu0 0.0
    %104 = vmatprep.subr.mxu0 0.0
    %105 = vmatpush1.msra.mxu0 0.0
    %106 = vmatprep.subr.mxu0 0.0
    %107 = vmatpush1.msra.mxu0 0.0
    %108 = vmatprep.mubr.f32.mxu0 0.0
    %109 = vmatmul.mubr.f32.gmra.mrb[0].mxu0 %v38
    %v110 = vpop.f32.mrb[0].mxu0
    %v111 = vadd.f32 %v34, %v110
    %v112 = vpop.f32.mrb[0].mxu0
    %113 = vdwg.mxu0
    %v114 = vmax.f32 %v111, 0.0
    %v115 = vld [vmem:[%s3] sm:$0xff]
    %v116 = vld [vmem:[%s3 + $0x8] sm:$0x3]
    %v117 = vld [vmem:[%s4] sm:$0x1]
    %v119 = vlaneseq
    %v120 = vshrl.u32 %v119, 7
    %v121 = vsub.s32 0, %v120
    %v122 = vrot.slane %v117, %v121
    %vm124 = vcmask 80896
    %v126 = vsel %vm124, %v114, 0
    %vm128 = vcmask 1041408
    %v130 = vsel %vm128, %v116, 0
    %132 = vmatprep.subr.mxu0 0.0
    %133 = vmatpush1.msra.mxu0 %v115
    %134 = vmatprep.subr.mxu0 0.0
    %135 = vmatpush1.msra.mxu0 %v130
    %136 = vmatprep.subr.mxu0 0.0
    %137 = vmatpush1.msra.mxu0 0.0
    %138 = vmatprep.subr.mxu0 0.0
    %139 = vmatpush1.msra.mxu0 0.0
    %140 = vmatprep.subr.mxu0 0.0
    %141 = vmatpush1.msra.mxu0 0.0
    %142 = vmatprep.subr.mxu0 0.0
    %143 = vmatpush1.msra.mxu0 0.0
    %144 = vmatprep.subr.mxu0 0.0
    %145 = vmatpush1.msra.mxu0 0.0
    %146 = vmatprep.subr.mxu0 0.0
    %147 = vmatpush1.msra.mxu0 0.0
    %148 = vmatprep.subr.mxu0 0.0
    %149 = vmatpush1.msra.mxu0 0.0
    %150 = vmatprep.subr.mxu0 0.0
    %151 = vmatpush1.msra.mxu0 0.0
    %152 = vmatprep.subr.mxu0 0.0
    %153 = vmatpush1.msra.mxu0 0.0
    %154 = vmatprep.subr.mxu0 0.0
    %155 = vmatpush1.msra.mxu0 0.0
    %156 = vmatprep.subr.mxu0 0.0
    %157 = vmatpush1.msra.mxu0 0.0
    %158 = vmatprep.subr.mxu0 0.0
    %159 = vmatpush1.msra.mxu0 0.0
    %160 = vmatprep.subr.mxu0 0.0
    %161 = vmatpush1.msra.mxu0 0.0
    %162 = vmatprep.subr.mxu0 0.0
    %163 = vmatpush1.msra.mxu0 0.0
    %164 = vmatprep.subr.mxu0 0.0
    %165 = vmatpush1.msra.mxu0 0.0
    %166 = vmatprep.subr.mxu0 0.0
    %167 = vmatpush1.msra.mxu0 0.0
    %168 = vmatprep.subr.mxu0 0.0
    %169 = vmatpush1.msra.mxu0 0.0
    %170 = vmatprep.subr.mxu0 0.0
    %171 = vmatpush1.msra.mxu0 0.0
    %172 = vmatprep.subr.mxu0 0.0
    %173 = vmatpush1.msra.mxu0 0.0
    %174 = vmatprep.subr.mxu0 0.0
    %175 = vmatpush1.msra.mxu0 0.0
    %176 = vmatprep.subr.mxu0 0.0
    %177 = vmatpush1.msra.mxu0 0.0
    %178 = vmatprep.subr.mxu0 0.0
    %179 = vmatpush1.msra.mxu0 0.0
    %180 = vmatprep.subr.mxu0 0.0
    %181 = vmatpush1.msra.mxu0 0.0
    %182 = vmatprep.subr.mxu0 0.0
    %183 = vmatpush1.msra.mxu0 0.0
    %184 = vmatprep.subr.mxu0 0.0
    %185 = vmatpush1.msra.mxu0 0.0
    %186 = vmatprep.subr.mxu0 0.0
    %187 = vmatpush1.msra.mxu0 0.0
    %188 = vmatprep.subr.mxu0 0.0
    %189 = vmatpush1.msra.mxu0 0.0
    %190 = vmatprep.subr.mxu0 0.0
    %191 = vmatpush1.msra.mxu0 0.0
    %192 = vmatprep.subr.mxu0 0.0
    %193 = vmatpush1.msra.mxu0 0.0
    %194 = vmatprep.subr.mxu0 0.0
    %195 = vmatpush1.msra.mxu0 0.0
    %196 = vmatprep.mubr.f32.mxu0 0.0
    %197 = vmatmul.mubr.f32.gmra.mrb[0].mxu0 %v126
    %v198 = vpop.f32.mrb[0].mxu0
    %v199 = vadd.f32 %v122, %v198
    %v200 = vpop.f32.mrb[0].mxu0
    %201 = vdwg.mxu0
    %v202 = vmax.f32 %v199, 0.0
    %v203 = vld [vmem:[%s5] sm:$0xf]
    %v204 = vld [vmem:[%s6] sm:$0x1]
    %v206 = vlaneseq
    %v207 = vshrl.u32 %v206, 7
    %v208 = vsub.s32 0, %v207
    %v209 = vrot.slane %v204, %v208
    %v212 = vsel %vm36, %v202, 0
    %v215 = vsel %vm40, %v203, 0
    %217 = vmatprep.subr.mxu0 0.0
    %218 = vmatpush1.msra.mxu0 %v215
    %219 = vmatprep.subr.mxu0 0.0
    %220 = vmatpush1.msra.mxu0 0.0
    %221 = vmatprep.subr.mxu0 0.0
    %222 = vmatpush1.msra.mxu0 0.0
    %223 = vmatprep.subr.mxu0 0.0
    %224 = vmatpush1.msra.mxu0 0.0
    %225 = vmatprep.subr.mxu0 0.0
    %226 = vmatpush1.msra.mxu0 0.0
    %227 = vmatprep.subr.mxu0 0.0
    %228 = vmatpush1.msra.mxu0 0.0
    %229 = vmatprep.subr.mxu0 0.0
    %230 = vmatpush1.msra.mxu0 0.0
    %231 = vmatprep.subr.mxu0 0.0
    %232 = vmatpush1.msra.mxu0 0.0
    %233 = vmatprep.subr.mxu0 0.0
    %234 = vmatpush1.msra.mxu0 0.0
    %235 = vmatprep.subr.mxu0 0.0
    %236 = vmatpush1.msra.mxu0 0.0
    %237 = vmatprep.subr.mxu0 0.0
    %238 = vmatpush1.msra.mxu0 0.0
    %239 = vmatprep.subr.mxu0 0.0
    %240 = vmatpush1.msra.mxu0 0.0
    %241 = vmatprep.subr.mxu0 0.0
    %242 = vmatpush1.msra.mxu0 0.0
    %243 = vmatprep.subr.mxu0 0.0
    %244 = vmatpush1.msra.mxu0 0.0
    %245 = vmatprep.subr.mxu0 0.0
    %246 = vmatpush1.msra.mxu0 0.0
    %247 = vmatprep.subr.mxu0 0.0
    %248 = vmatpush1.msra.mxu0 0.0
    %249 = vmatprep.subr.mxu0 0.0
    %250 = vmatpush1.msra.mxu0 0.0
    %251 = vmatprep.subr.mxu0 0.0
    %252 = vmatpush1.msra.mxu0 0.0
    %253 = vmatprep.subr.mxu0 0.0
    %254 = vmatpush1.msra.mxu0 0.0
    %255 = vmatprep.subr.mxu0 0.0
    %256 = vmatpush1.msra.mxu0 0.0
    %257 = vmatprep.subr.mxu0 0.0
    %258 = vmatpush1.msra.mxu0 0.0
    %259 = vmatprep.subr.mxu0 0.0
    %260 = vmatpush1.msra.mxu0 0.0
    %261 = vmatprep.subr.mxu0 0.0
    %262 = vmatpush1.msra.mxu0 0.0
    %263 = vmatprep.subr.mxu0 0.0
    %264 = vmatpush1.msra.mxu0 0.0
    %265 = vmatprep.subr.mxu0 0.0
    %266 = vmatpush1.msra.mxu0 0.0
    %267 = vmatprep.subr.mxu0 0.0
    %268 = vmatpush1.msra.mxu0 0.0
    %269 = vmatprep.subr.mxu0 0.0
    %270 = vmatpush1.msra.mxu0 0.0
    %271 = vmatprep.subr.mxu0 0.0
    %272 = vmatpush1.msra.mxu0 0.0
    %273 = vmatprep.subr.mxu0 0.0
    %274 = vmatpush1.msra.mxu0 0.0
    %275 = vmatprep.subr.mxu0 0.0
    %276 = vmatpush1.msra.mxu0 0.0
    %277 = vmatprep.subr.mxu0 0.0
    %278 = vmatpush1.msra.mxu0 0.0
    %279 = vmatprep.subr.mxu0 0.0
    %280 = vmatpush1.msra.mxu0 0.0
    %281 = vmatprep.mubr.f32.mxu0 0.0
    %282 = vmatmul.mubr.f32.gmra.mrb[0].mxu0 %v212
    %v283 = vpop.f32.mrb[0].mxu0
    %v284 = vadd.f32 %v209, %v283
    %v285 = vpop.f32.mrb[0].mxu0
    %286 = vdwg.mxu0
    %vm287 = vcmask 25600
    %288 = vst.msk [vmem:[#allocation2] sm:$0x3] %vm287, %v284
    // Predicated region
    $region30: #{weather_nn_forward.1} parent=1 // pred_check
      _
    $region31: #{weather_nn_forward.1} parent=1 // pred_check_branch
      %290 = sbr.rel (0) target = $region33
    $region32: #{weather_nn_forward.1} parent=1 // pred_region
      %s292 = ssub.s32 32, 32
      %293 = vsyncadd [#allocation3], %s292
      %s295 = sshll.u32 [#allocation2], 4
      %s296 = int_to_ptr.vmem [resolvable:$true] %s295
      %298 = dma.vmem_to_hbm [thread:$0]  %s296, 32, %s7, [#allocation3]
    $region33: #{weather_nn_forward.1} parent=1 // pred_fallthru
      _
    // Predicated region
    $region34: #{weather_nn_forward.1} parent=1 // pred_check
      _
    $region35: #{weather_nn_forward.1} parent=1 // pred_check_branch
      %300 = sbr.rel (0) target = $region37
    $region36: #{weather_nn_forward.1} parent=1 // pred_region
      %301 = dma.done [#allocation3], 32
    $region37: #{weather_nn_forward.1} parent=1 // pred_fallthru
      _
    %302 = vsyncpa [#allocation3], 1

</llo_original>
